<compile_context>
chip_gen: v7x
topology: tpu7x:2x2x1
jax: 0.10.0
libtpu: 0.0.40
codegen_flags: <defaults>
</compile_context>

<pallas_src>
import functools

import jax
import jax.numpy as jnp
import numpy as np
from jax.experimental import pallas as pl
from jax.experimental.pallas import tpu as pltpu


def _cdiv(a: int, b: int) -> int:
    return -(-a // b)


def _fir_poly_kernel(taps_ref, xwin_ref, out_ref, *, n_phases, n_taps, row_len, rows):
    """Polyphase FIR over lane-dense rows.

    taps_ref : SMEM (n_phases, n_taps)                 flipped (+normalised) taps per phase
    xwin_ref : VMEM (n_phases, rows, row_len+n_taps-1) decimated, windowed signal rows (+halo)
    out_ref  : VMEM (rows, row_len)                    decimated outputs, lane-dense
    """
    acc = jnp.zeros((rows, row_len), jnp.float32)
    for p in range(n_phases):
        # Hoist: one load of the whole phase tile; per-tap views are static
        # slices of the in-register value (lane shifts on the XLU, not vld).
        xw = xwin_ref[p]                       # (rows, row_len + n_taps - 1)
        for q in range(n_taps):
            acc = acc + taps_ref[p, q] * xw[:, q:q + row_len]
    out_ref[...] = acc


class FIRfilterPallas:
    """JAX/Pallas port of lib/filtering.py::FIRfilter.forward."""

    def __init__(self, filter_weights, stride: int = 1, normalize: bool = False):
        w = np.asarray(np.copy(filter_weights), dtype=np.float64)
        self.filter_length = L = int(w.shape[0])
        self.padding = ((L - 1) // 2, (L - L % 2) // 2)
        self.stride = s = int(stride)
        self.normalize = bool(normalize)

        # Fold L2 normalisation into the taps (one-time host cost).
        if self.normalize:
            w = w / np.sqrt(np.sum(np.square(w)))
        wf = w[::-1]                                     # torch.flip -> true convolution

        # Polyphase decomposition of the flipped taps: y[m] = sum_p sum_q
        #   taps[p, q] * xpad[m*s + q*s + p]
        self.n_taps = Lq = _cdiv(L, s)                   # taps per phase
        self.n_phases = n_ph = min(s, L)                 # phases p >= L are all-zero
        taps = np.zeros((n_ph, Lq), dtype=np.float32)
        for p in range(n_ph):
            for q in range(Lq):
                k = q * s + p
                if k < L:
                    taps[p, q] = wf[k]
        self.phase_taps = jnp.asarray(taps)

    def __call__(self, x):
        x = jnp.asarray(x, jnp.float32)
        assert x.ndim == 1, "FIRfilter.forward expects a 1-D signal"
        N = int(x.shape[0])
        L = self.filter_length
        s = self.stride
        Lq = self.n_taps
        n_ph = self.n_phases
        M = _cdiv(N, s)                                  # conv1d(stride=s) output length

        # ---- tile geometry: lane-dense rows, >=8 sublane rows per grid step ----
        ROW_LEN = min(1024, max(128, 128 * _cdiv(_cdiv(M, 8), 128)))
        rows_needed = _cdiv(M, ROW_LEN)
        rows_per_blk = 8 * min(8, _cdiv(rows_needed, 8))          # 8 .. 64 rows / block
        n_blocks = _cdiv(rows_needed, rows_per_blk)
        R = rows_per_blk * n_blocks
        halo = Lq - 1
        w_lanes = ROW_LEN + halo

        # ---- build the polyphase-decimated, windowed input (cheap XLA glue) ----
        pad_l, pad_r = self.padding
        xpad = jnp.pad(x, (pad_l, pad_r))                          # length N + L - 1
        j_need = max(R * ROW_LEN + halo, _cdiv(N + L - 1, s))
        flat_len = s * j_need
        xflat = jnp.pad(xpad, (0, flat_len - (N + L - 1)))
        xphase = xflat.reshape(j_need, s).T[:n_ph]                 # (n_ph, j_need)
        xmain = xphase[:, :R * ROW_LEN].reshape(n_ph, R, ROW_LEN)
        if halo > 0:
            tail = xphase[:, R * ROW_LEN:R * ROW_LEN + halo]       # (n_ph, halo)
            halo_rows = jnp.concatenate(
                [xmain[:, 1:, :halo], tail[:, None, :]], axis=1)   # (n_ph, R, halo)
            xwin = jnp.concatenate([xmain, halo_rows], axis=2)     # (n_ph, R, w_lanes)
        else:
            xwin = xmain

        kernel = functools.partial(
            _fir_poly_kernel,
            n_phases=n_ph, n_taps=Lq, row_len=ROW_LEN, rows=rows_per_blk)

        y2d = pl.pallas_call(
            kernel,
            out_shape=jax.ShapeDtypeStruct((R, ROW_LEN), jnp.float32),
            grid=(n_blocks,),
            in_specs=[
                # taps: whole (tiny) table resident in SMEM for all grid steps
                pl.BlockSpec(memory_space=pltpu.MemorySpace.SMEM),
                # signal: one block of rows (+ lane halo) per grid step, pipelined
                pl.BlockSpec((n_ph, rows_per_blk, w_lanes), lambda i: (0, i, 0)),
            ],
            out_specs=pl.BlockSpec((rows_per_blk, ROW_LEN), lambda i: (i, 0)),
            compiler_params=pltpu.CompilerParams(
                dimension_semantics=("parallel",),   # row-blocks independent -> megacore
            ),
        )(self.phase_taps, xwin)

        return y2d.reshape(R * ROW_LEN)[:M]


def _reference(x, w, stride, normalize):
    """Pure-numpy reference matching the torch forward()."""
    L = len(w)
    pad = ((L - 1) // 2, (L - L % 2) // 2)
    xpad = np.pad(np.asarray(x, np.float64), pad, mode="constant")
    y = np.convolve(xpad, np.asarray(w, np.float64), mode="valid")[::stride]
    if normalize:
        y = y / np.sqrt(np.sum(np.square(np.asarray(w, np.float64))))
    return y


if __name__ == "__main__":
    key = jax.random.PRNGKey(0)
    k_x, k_w = jax.random.split(key)

    N = 256          # signal length
    L = 9            # filter taps

    x = jax.random.normal(k_x, (N,), dtype=jnp.float32)
    filter_weights = np.asarray(jax.random.normal(k_w, (L,), dtype=jnp.float32))

    # exercise both the plain (stride=1) and the polyphase (stride=2, normalized) paths
    for stride, normalize in [(1, False), (2, True)]:
        fir = FIRfilterPallas(filter_weights, stride=stride, normalize=normalize)
        y = jax.block_until_ready(fir(x))
        y_ref = _reference(np.asarray(x), filter_weights, stride, normalize)
        assert y.shape == y_ref.shape, (stride, y.shape, y_ref.shape)
        np.testing.assert_allclose(np.asarray(y, np.float64), y_ref,
                                   rtol=1e-4, atol=1e-4)

    print("KERNEL_OK")
</pallas_src>

<mosaic_0001>
module attributes {stable_mosaic.version = 11 : i64} {
  func.func @_fir_poly_kernel(%arg0: i32, %arg1: memref<1x9xf32, #tpu.memory_space<smem>>, %arg2: memref<1x8x136xf32, #tpu.memory_space<vmem>>, %arg3: memref<8x128xf32, #tpu.memory_space<vmem>>) attributes {dimension_semantics = [#tpu.dimension_semantics<parallel>], iteration_bounds = array<i64: 1>, scalar_prefetch = 0 : i64, scratch_operands = 0 : i64, tpu.core_type = #tpu.core_type<tc>, window_params = [{transform_indices = @transform_0, window_bounds = array<i64: 1, 9>}, {transform_indices = @transform_1, window_bounds = array<i64: 1, 8, 136>}, {transform_indices = @transform_2, window_bounds = array<i64: 8, 128>}]} {
    %cst = arith.constant 0.000000e+00 : f32
    %0 = vector.broadcast %cst : f32 to vector<8x128xf32>
    %c0 = arith.constant 0 : index
    %c0_0 = arith.constant 0 : index
    %c0_1 = arith.constant 0 : index
    %1 = vector.load %arg2[%c0, %c0_0, %c0_1] : memref<1x8x136xf32, #tpu.memory_space<vmem>>, vector<1x8x136xf32>
    %2 = vector.shape_cast %1 : vector<1x8x136xf32> to vector<8x136xf32>
    %c0_2 = arith.constant 0 : index
    %c0_3 = arith.constant 0 : index
    %3 = memref.load %arg1[%c0_2, %c0_3] : memref<1x9xf32, #tpu.memory_space<smem>>
    %4 = vector.extract_strided_slice %2 {offsets = [0, 0], sizes = [8, 128], strides = [1, 1]} : vector<8x136xf32> to vector<8x128xf32>
    %5 = vector.broadcast %3 : f32 to vector<8x128xf32>
    %6 = arith.mulf %5, %4 : vector<8x128xf32>
    %7 = arith.addf %0, %6 : vector<8x128xf32>
    %c0_4 = arith.constant 0 : index
    %c1 = arith.constant 1 : index
    %8 = memref.load %arg1[%c0_4, %c1] : memref<1x9xf32, #tpu.memory_space<smem>>
    %9 = vector.extract_strided_slice %2 {offsets = [0, 1], sizes = [8, 128], strides = [1, 1]} : vector<8x136xf32> to vector<8x128xf32>
    %10 = vector.broadcast %8 : f32 to vector<8x128xf32>
    %11 = arith.mulf %10, %9 : vector<8x128xf32>
    %12 = arith.addf %7, %11 : vector<8x128xf32>
    %c0_5 = arith.constant 0 : index
    %c2 = arith.constant 2 : index
    %13 = memref.load %arg1[%c0_5, %c2] : memref<1x9xf32, #tpu.memory_space<smem>>
    %14 = vector.extract_strided_slice %2 {offsets = [0, 2], sizes = [8, 128], strides = [1, 1]} : vector<8x136xf32> to vector<8x128xf32>
    %15 = vector.broadcast %13 : f32 to vector<8x128xf32>
    %16 = arith.mulf %15, %14 : vector<8x128xf32>
    %17 = arith.addf %12, %16 : vector<8x128xf32>
    %c0_6 = arith.constant 0 : index
    %c3 = arith.constant 3 : index
    %18 = memref.load %arg1[%c0_6, %c3] : memref<1x9xf32, #tpu.memory_space<smem>>
    %19 = vector.extract_strided_slice %2 {offsets = [0, 3], sizes = [8, 128], strides = [1, 1]} : vector<8x136xf32> to vector<8x128xf32>
    %20 = vector.broadcast %18 : f32 to vector<8x128xf32>
    %21 = arith.mulf %20, %19 : vector<8x128xf32>
    %22 = arith.addf %17, %21 : vector<8x128xf32>
    %c0_7 = arith.constant 0 : index
    %c4 = arith.constant 4 : index
    %23 = memref.load %arg1[%c0_7, %c4] : memref<1x9xf32, #tpu.memory_space<smem>>
    %24 = vector.extract_strided_slice %2 {offsets = [0, 4], sizes = [8, 128], strides = [1, 1]} : vector<8x136xf32> to vector<8x128xf32>
    %25 = vector.broadcast %23 : f32 to vector<8x128xf32>
    %26 = arith.mulf %25, %24 : vector<8x128xf32>
    %27 = arith.addf %22, %26 : vector<8x128xf32>
    %c0_8 = arith.constant 0 : index
    %c5 = arith.constant 5 : index
    %28 = memref.load %arg1[%c0_8, %c5] : memref<1x9xf32, #tpu.memory_space<smem>>
    %29 = vector.extract_strided_slice %2 {offsets = [0, 5], sizes = [8, 128], strides = [1, 1]} : vector<8x136xf32> to vector<8x128xf32>
    %30 = vector.broadcast %28 : f32 to vector<8x128xf32>
    %31 = arith.mulf %30, %29 : vector<8x128xf32>
    %32 = arith.addf %27, %31 : vector<8x128xf32>
    %c0_9 = arith.constant 0 : index
    %c6 = arith.constant 6 : index
    %33 = memref.load %arg1[%c0_9, %c6] : memref<1x9xf32, #tpu.memory_space<smem>>
    %34 = vector.extract_strided_slice %2 {offsets = [0, 6], sizes = [8, 128], strides = [1, 1]} : vector<8x136xf32> to vector<8x128xf32>
    %35 = vector.broadcast %33 : f32 to vector<8x128xf32>
    %36 = arith.mulf %35, %34 : vector<8x128xf32>
    %37 = arith.addf %32, %36 : vector<8x128xf32>
    %c0_10 = arith.constant 0 : index
    %c7 = arith.constant 7 : index
    %38 = memref.load %arg1[%c0_10, %c7] : memref<1x9xf32, #tpu.memory_space<smem>>
    %39 = vector.extract_strided_slice %2 {offsets = [0, 7], sizes = [8, 128], strides = [1, 1]} : vector<8x136xf32> to vector<8x128xf32>
    %40 = vector.broadcast %38 : f32 to vector<8x128xf32>
    %41 = arith.mulf %40, %39 : vector<8x128xf32>
    %42 = arith.addf %37, %41 : vector<8x128xf32>
    %c0_11 = arith.constant 0 : index
    %c8 = arith.constant 8 : index
    %43 = memref.load %arg1[%c0_11, %c8] : memref<1x9xf32, #tpu.memory_space<smem>>
    %44 = vector.extract_strided_slice %2 {offsets = [0, 8], sizes = [8, 128], strides = [1, 1]} : vector<8x136xf32> to vector<8x128xf32>
    %45 = vector.broadcast %43 : f32 to vector<8x128xf32>
    %46 = arith.mulf %45, %44 : vector<8x128xf32>
    %47 = arith.addf %42, %46 : vector<8x128xf32>
    %c0_12 = arith.constant 0 : index
    %c0_13 = arith.constant 0 : index
    %48 = vector.load %arg3[%c0_12, %c0_13] : memref<8x128xf32, #tpu.memory_space<vmem>>, vector<8x128xf32>
    tpu.vector_store %arg3[%c0_12, %c0_13], %47 {strides = array<i32>} : memref<8x128xf32, #tpu.memory_space<vmem>>, vector<8x128xf32>,
    return
  }
  func.func @transform_0(%arg0: i32) -> (i32, i32) {
    %c0_i32 = arith.constant 0 : i32
    %c0_i32_0 = arith.constant 0 : i32
    %c0_i32_1 = arith.constant 0 : i32
    return %c0_i32, %c0_i32_0 : i32, i32
  }
  func.func @transform_1(%arg0: i32) -> (i32, i32, i32) {
    %c0_i32 = arith.constant 0 : i32
    %c0_i32_0 = arith.constant 0 : i32
    %c0_i32_1 = arith.constant 0 : i32
    return %c0_i32, %arg0, %c0_i32_0 : i32, i32, i32
  }
  func.func @transform_2(%arg0: i32) -> (i32, i32) {
    %c0_i32 = arith.constant 0 : i32
    %c0_i32_0 = arith.constant 0 : i32
    return %arg0, %c0_i32 : i32, i32
  }
}

</mosaic_0001>

<llo_original>
// kernel: tpu_custom_call.1
$region0: #{tpu_custom_call.1}
  #allocation0 [shape = 'u32[]', space=smem, size = 0x4, offset = 0x4, fixed_abs, tag = 'smem constant byte address 0x4 - core index']
  #allocation1 [shape = 'u32[144,128]{1,0:T(1,128)}', space=vmem, size = 0x12000, scoped, tag = 'internal scratch']
  %s0 = inlined_call_operand.hbm [shape: f32[1,9], index: 0, kind: input, shape index: {}]
  %s1 = inlined_call_operand.hbm [shape: f32[1,8,136], index: 1, kind: input, shape index: {}]
  %s2 = inlined_call_operand.hbm [shape: f32[8,128], index: 2, kind: output, shape index: {}]
  %s3 = sld [smem:[#allocation0]]
  $region26: #{tpu_custom_call.1} parent=0
    _
  %s5 = ssub.s32 1, %s3
  %s6 = scalar_select 0, %s5, %s3
  $region1: #{tpu_custom_call.1} parent=0
    #allocation2 [shape = 'u8[512]{0}', space=smem, size = 0x200, scoped, tag = 'input window, operand 0, single buffered']
    #allocation3 [shape = 's32[1]{0}', space=sflag, size = 0x4, scoped, tag = 'scoped memory for tpu_custom_call.1']
    #allocation4 [shape = 's32[1]{0}', space=sflag, size = 0x4, scoped, tag = 'scoped memory for tpu_custom_call.1']
    #allocation5 [shape = 's32[1]{0}', space=sflag, size = 0x4, scoped, tag = 'scoped memory for tpu_custom_call.1']
    #allocation6 [shape = 'u8[8192]{0}', space=vmem, size = 0x2000, scoped, tag = 'input window, operand 1, single buffered']
    #allocation7 [shape = 'u8[4096]{0}', space=vmem, size = 0x1000, scoped, tag = 'output window, operand 0, single buffered']
    %7 = vsyncpa [#allocation5], 0
    %8 = vsyncpa [#allocation3], 0
    %9 = vsyncpa [#allocation4], 0
    // Predicated region
    $region2: #{tpu_custom_call.1} parent=1 // pred_check
      _
    $region3: #{tpu_custom_call.1} parent=1 // pred_check_branch
      %11 = sbr.rel (0) target = $region5
    $region4: #{tpu_custom_call.1} parent=1 // pred_region
      %s13 = ssub.s32 16, 16
      %14 = vsyncadd [#allocation5], %s13
      %17 = dma.hbm_to_smem %s0, 16, [#allocation2], [#allocation5]
    $region5: #{tpu_custom_call.1} parent=1 // pred_fallthru
      _
    // Predicated region
    $region6: #{tpu_custom_call.1} parent=1 // pred_check
      _
    $region7: #{tpu_custom_call.1} parent=1 // pred_check_branch
      %19 = sbr.rel (0) target = $region9
    $region8: #{tpu_custom_call.1} parent=1 // pred_region
      %s21 = ssub.s32 256, 256
      %22 = vsyncadd [#allocation3], %s21
      %s24 = sshll.u32 [#allocation6], 4
      %s25 = int_to_ptr.vmem [resolvable:$true] %s24
      %27 = dma.hbm_to_vmem [thread:$0]  %s1, 256, %s25, [#allocation3]
    $region9: #{tpu_custom_call.1} parent=1 // pred_fallthru
      _
    // Predicated region
    $region10: #{tpu_custom_call.1} parent=1 // pred_check
      _
    $region11: #{tpu_custom_call.1} parent=1 // pred_check_branch
      %29 = sbr.rel (0) target = $region13
    $region12: #{tpu_custom_call.1} parent=1 // pred_region
      %30 = dma.done [#allocation5], 16
    $region13: #{tpu_custom_call.1} parent=1 // pred_fallthru
      _
    // Predicated region
    $region14: #{tpu_custom_call.1} parent=1 // pred_check
      _
    $region15: #{tpu_custom_call.1} parent=1 // pred_check_branch
      %32 = sbr.rel (0) target = $region17
    $region16: #{tpu_custom_call.1} parent=1 // pred_region
      %33 = dma.done [#allocation3], 256
    $region17: #{tpu_custom_call.1} parent=1 // pred_fallthru
      _
    %34 = sfence
    %v35 = vld [vmem:[#allocation6] sm:$0xff]
    %v36 = vld [vmem:[#allocation6 + $0x8] sm:$0xff]
    %s37 = sld [smem:[#allocation2]]
    %v38 = vstv %s37
    %v39 = vmul.f32 %v38, %v35
    %v40 = vadd.f32 %v39, 0.0
    %s41 = sld [smem:[#allocation2 + $0x1]]
    %v42 = vstv %s41
    %v43 = vmul.f32 %v42, %v35
    %v44 = vmul.f32 %v42, %v36
    %47 = vrot.lane.b32.xlu0 %v43, 127
    %v48 = vpop.permute.xlu0 %47
    %49 = vrot.lane.b32.xlu0 %v44, 127
    %v50 = vpop.permute.xlu0 %49
    %vm51 = vcmask 1039360
    %v52 = vsel %vm51, %v48, %v50
    %v54 = vadd.f32 %v40, %v52
    %s55 = sld [smem:[#allocation2 + $0x2]]
    %v56 = vstv %s55
    %v57 = vmul.f32 %v56, %v35
    %v58 = vmul.f32 %v56, %v36
    %61 = vrot.lane.b32.xlu0 %v57, 126
    %v62 = vpop.permute.xlu0 %61
    %63 = vrot.lane.b32.xlu0 %v58, 126
    %v64 = vpop.permute.xlu0 %63
    %vm65 = vcmask 1031168
    %v66 = vsel %vm65, %v62, %v64
    %v68 = vadd.f32 %v54, %v66
    %s69 = sld [smem:[#allocation2 + $0x3]]
    %v70 = vstv %s69
    %v71 = vmul.f32 %v70, %v35
    %v72 = vmul.f32 %v70, %v36
    %75 = vrot.lane.b32.xlu0 %v71, 125
    %v76 = vpop.permute.xlu0 %75
    %77 = vrot.lane.b32.xlu0 %v72, 125
    %v78 = vpop.permute.xlu0 %77
    %vm79 = vcmask 1022976
    %v80 = vsel %vm79, %v76, %v78
    %v82 = vadd.f32 %v68, %v80
    %s83 = sld [smem:[#allocation2 + $0x4]]
    %v84 = vstv %s83
    %v85 = vmul.f32 %v84, %v35
    %v86 = vmul.f32 %v84, %v36
    %89 = vrot.lane.b32.xlu0 %v85, 124
    %v90 = vpop.permute.xlu0 %89
    %91 = vrot.lane.b32.xlu0 %v86, 124
    %v92 = vpop.permute.xlu0 %91
    %vm93 = vcmask 1014784
    %v94 = vsel %vm93, %v90, %v92
    %v96 = vadd.f32 %v82, %v94
    %s97 = sld [smem:[#allocation2 + $0x5]]
    %v98 = vstv %s97
    %v99 = vmul.f32 %v98, %v35
    %v100 = vmul.f32 %v98, %v36
    %103 = vrot.lane.b32.xlu0 %v99, 123
    %v104 = vpop.permute.xlu0 %103
    %105 = vrot.lane.b32.xlu0 %v100, 123
    %v106 = vpop.permute.xlu0 %105
    %vm107 = vcmask 1006592
    %v108 = vsel %vm107, %v104, %v106
    %v110 = vadd.f32 %v96, %v108
    %s111 = sld [smem:[#allocation2 + $0x6]]
    %v112 = vstv %s111
    %v113 = vmul.f32 %v112, %v35
    %v114 = vmul.f32 %v112, %v36
    %117 = vrot.lane.b32.xlu0 %v113, 122
    %v118 = vpop.permute.xlu0 %117
    %119 = vrot.lane.b32.xlu0 %v114, 122
    %v120 = vpop.permute.xlu0 %119
    %vm121 = vcmask 998400
    %v122 = vsel %vm121, %v118, %v120
    %v124 = vadd.f32 %v110, %v122
    %s125 = sld [smem:[#allocation2 + $0x7]]
    %v126 = vstv %s125
    %v127 = vmul.f32 %v126, %v35
    %v128 = vmul.f32 %v126, %v36
    %131 = vrot.lane.b32.xlu0 %v127, 121
    %v132 = vpop.permute.xlu0 %131
    %133 = vrot.lane.b32.xlu0 %v128, 121
    %v134 = vpop.permute.xlu0 %133
    %vm135 = vcmask 990208
    %v136 = vsel %vm135, %v132, %v134
    %v138 = vadd.f32 %v124, %v136
    %s139 = sld [smem:[#allocation2 + $0x8]]
    %v140 = vstv %s139
    %v141 = vmul.f32 %v140, %v35
    %v142 = vmul.f32 %v140, %v36
    %145 = vrot.lane.b32.xlu0 %v141, 120
    %v146 = vpop.permute.xlu0 %145
    %147 = vrot.lane.b32.xlu0 %v142, 120
    %v148 = vpop.permute.xlu0 %147
    %vm149 = vcmask 982016
    %v150 = vsel %vm149, %v146, %v148
    %v152 = vadd.f32 %v138, %v150
    %153 = vst [vmem:[#allocation7] sm:$0xff] %v152
    // Predicated region
    $region18: #{tpu_custom_call.1} parent=1 // pred_check
      _
    $region19: #{tpu_custom_call.1} parent=1 // pred_check_branch
      %155 = sbr.rel (0) target = $region21
    $region20: #{tpu_custom_call.1} parent=1 // pred_region
      %s157 = ssub.s32 128, 128
      %158 = vsyncadd [#allocation4], %s157
      %s160 = sshll.u32 [#allocation7], 4
      %s161 = int_to_ptr.vmem [resolvable:$true] %s160
      %163 = dma.vmem_to_hbm [thread:$0]  %s161, 128, %s2, [#allocation4]
    $region21: #{tpu_custom_call.1} parent=1 // pred_fallthru
      _
    // Predicated region
    $region22: #{tpu_custom_call.1} parent=1 // pred_check
      _
    $region23: #{tpu_custom_call.1} parent=1 // pred_check_branch
      %165 = sbr.rel (0) target = $region25
    $region24: #{tpu_custom_call.1} parent=1 // pred_region
      %166 = dma.done [#allocation4], 128
    $region25: #{tpu_custom_call.1} parent=1 // pred_fallthru
      _
    %167 = vsyncpa [#allocation3], 1
    %168 = vsyncpa [#allocation4], 1
    %169 = vsyncpa [#allocation5], 1

</llo_original>
